<compile_context>
chip_gen: v7x
topology: tpu7x:2x2x1
jax: 0.10.0
libtpu: 0.0.40
codegen_flags: <defaults>
</compile_context>

<pallas_src>
import functools
import math

import jax
import jax.numpy as jnp
from jax.experimental import pallas as pl
from jax.experimental.pallas import tpu as pltpu


def _round_up(a, m):
    return ((a + m - 1) // m) * m


def _pick_row_tile(h):
    for t in (32, 16, 8):
        if h % t == 0 and h // t >= 2:
            return t
    return h


# ----------------------------------------------------------------------------
# pltpu.roll probe: check that a rank-3 sublane roll lowers on this backend and
# detect its direction convention vs jnp.roll.  If unavailable, the main kernel
# falls back to direct (unaligned) window slices -- correct, just slower.
# ----------------------------------------------------------------------------
_ROLL_PROBE = {}


def _roll_probe_kernel(x_ref, o_ref):
    o_ref[...] = pltpu.roll(x_ref[...], shift=1, axis=1)


def _probe_roll():
    if "v" not in _ROLL_PROBE:
        x = jnp.arange(8 * 64 * 8, dtype=jnp.float32).reshape(8, 64, 8)
        try:
            y = pl.pallas_call(
                _roll_probe_kernel,
                out_shape=jax.ShapeDtypeStruct(x.shape, x.dtype))(x)
            y = jax.block_until_ready(y)
            if bool(jnp.array_equal(y, jnp.roll(x, 1, axis=1))):
                _ROLL_PROBE["v"] = (True, 1)
            elif bool(jnp.array_equal(y, jnp.roll(x, -1, axis=1))):
                _ROLL_PROBE["v"] = (True, -1)
            else:
                _ROLL_PROBE["v"] = (False, 1)
        except Exception:
            _ROLL_PROBE["v"] = (False, 1)
    return _ROLL_PROBE["v"]


# ----------------------------------------------------------------------------
# Kernel A: global branch.  Per batch element:
#   pooled = mean_{H,W}(x); y5 = relu(pooled @ Wg' + tg); out = y5 @ Wf5' + tf
# Output (N, 1, mid) is the per-batch bias of the fused final conv.
# ----------------------------------------------------------------------------
def _global_branch_kernel(x_ref, wg_ref, tg_ref, wf5_ref, tf_ref, o_ref, *, inv_hw):
    h, w, cin = x_ref.shape[1], x_ref.shape[2], x_ref.shape[3]
    xs = x_ref[0].astype(jnp.float32).reshape(h * w, cin)
    pooled = jnp.sum(xs, axis=0, keepdims=True) * inv_hw            # (1, cin)
    y5 = jnp.dot(pooled.astype(wg_ref.dtype), wg_ref[...],
                 preferred_element_type=jnp.float32) + tg_ref[...]
    y5 = jnp.maximum(y5, 0.0)                                       # (1, mid)
    c5 = jnp.dot(y5.astype(wf5_ref.dtype), wf5_ref[...],
                 preferred_element_type=jnp.float32)
    o_ref[0] = (c5 + tf_ref[...]).astype(o_ref.dtype)


def _global_branch_call(x, p, compute_dtype):
    n, h, w, cin = x.shape
    mid = p["w1k"].shape[1]
    kern = functools.partial(_global_branch_kernel, inv_hw=1.0 / float(h * w))
    return pl.pallas_call(
        kern,
        out_shape=jax.ShapeDtypeStruct((n, 1, mid), jnp.float32),
        grid_spec=pltpu.PrefetchScalarGridSpec(
            num_scalar_prefetch=0,
            grid=(n,),
            in_specs=[
                pl.BlockSpec((1, h, w, cin), lambda i: (i, 0, 0, 0)),
                pl.BlockSpec((cin, mid), lambda i: (0, 0)),
                pl.BlockSpec((1, mid), lambda i: (0, 0)),
                pl.BlockSpec((mid, mid), lambda i: (0, 0)),
                pl.BlockSpec((1, mid), lambda i: (0, 0)),
            ],
            out_specs=pl.BlockSpec((1, 1, mid), lambda i: (i, 0, 0)),
        ),
        compiler_params=pltpu.CompilerParams(
            dimension_semantics=("parallel",),
            vmem_limit_bytes=32 * 1024 * 1024),
    )(x, p["wgk"].astype(compute_dtype), p["tg"],
      p["wf_gap"].astype(compute_dtype), p["tf"])


# ----------------------------------------------------------------------------
# Kernel B: fused aspp1 + aspp2/3/4 + (concat . final 1x1 conv) + BN bias + ReLU.
# Grid = (N, H // th).  The padded batch element lives in a persistent VMEM
# scratch, built once per batch element at row-tile 0.
# ----------------------------------------------------------------------------
def _aspp_main_kernel(x_ref, w1_ref, wd_ref, wf_ref, bb_ref, bf_ref, o_ref, xpad_ref,
                      *, H, W, cin, mid, dils, pad_t, pad_l, th, use_roll, roll_sign):
    i = pl.program_id(1)
    Wp = xpad_ref.shape[1]

    # Single zero-pad, VMEM-only, reused by all row tiles of this batch element.
    @pl.when(i == 0)
    def _():
        xpad_ref[...] = jnp.zeros_like(xpad_ref)
        xpad_ref[pl.ds(pad_t, H), pl.ds(pad_l, W), :] = x_ref[0]

    r0 = i * th  # first output row of this tile

    # ---- aspp1: 1x1 conv (BN scale folded) + bias + ReLU, then its chunk of the
    #      fused final conv (w_conv1 decomposed into per-branch (mid, mid) chunks).
    xc = x_ref[0, pl.ds(r0, th), :, :].reshape(th * W, cin)
    y = jnp.dot(xc, w1_ref[...], preferred_element_type=jnp.float32) + bb_ref[0]
    y = jnp.maximum(y, 0.0)
    acc = jnp.dot(y.astype(wf_ref.dtype), wf_ref[0], preferred_element_type=jnp.float32)

    # ---- aspp2/3/4: 3x3 dilated convs (9 MXU taps each).  kh -> contiguous row slab,
    #      kw -> XLU roll + aligned central slice (no unaligned relayout copies).
    for b, d in enumerate(dils):
        conv = None
        for kh in range(3):
            slab = xpad_ref[pl.ds(r0 + pad_t + (kh - 1) * d, th), :, :]   # (th, Wp, cin)
            for kw in range(3):
                s = (kw - 1) * d
                if s == 0:
                    window = slab[:, pad_l:pad_l + W, :]
                elif use_roll:
                    rolled = pltpu.roll(slab, shift=(roll_sign * (-s)) % Wp, axis=1)
                    window = rolled[:, pad_l:pad_l + W, :]
                else:
                    window = slab[:, pad_l + s:pad_l + s + W, :]
                tap = jnp.dot(window.reshape(th * W, cin),
                              wd_ref[b * 9 + kh * 3 + kw],
                              preferred_element_type=jnp.float32)
                conv = tap if conv is None else conv + tap
        yb = jnp.maximum(conv + bb_ref[b + 1], 0.0)
        acc = acc + jnp.dot(yb.astype(wf_ref.dtype), wf_ref[b + 1],
                            preferred_element_type=jnp.float32)

    # ---- fused final-conv epilogue: per-batch bias already holds the global-branch
    #      contribution plus the final BN bias (so no (N,H,W,mid) broadcast of y5).
    out = jnp.maximum(acc + bf_ref[0], 0.0)
    o_ref[0] = out.reshape(th, W, mid).astype(o_ref.dtype)


def _aspp_main_call(x, p, bf, compute_dtype):
    n, H, W, cin = x.shape
    mid = p["w1k"].shape[1]
    dils = tuple(int(d) for d in p["dils"])
    dmax = max(dils)
    pad_t = dmax                               # rows need no sublane alignment
    pad_l = _round_up(dmax, 8)                 # aligned central window start
    Wp = _round_up(pad_l + W + dmax, 8)        # padded width, multiple of 8
    Hp = pad_t + H + dmax
    th = _pick_row_tile(H)
    use_roll, roll_sign = _probe_roll()

    kern = functools.partial(
        _aspp_main_kernel, H=H, W=W, cin=cin, mid=mid, dils=dils,
        pad_t=pad_t, pad_l=pad_l, th=th, use_roll=use_roll, roll_sign=roll_sign)

    return pl.pallas_call(
        kern,
        out_shape=jax.ShapeDtypeStruct((n, H, W, mid), jnp.float32),
        grid_spec=pltpu.PrefetchScalarGridSpec(
            num_scalar_prefetch=0,
            grid=(n, H // th),
            in_specs=[
                pl.BlockSpec((1, H, W, cin), lambda b, i: (b, 0, 0, 0)),   # x (fetched once per b)
                pl.BlockSpec((cin, mid), lambda b, i: (0, 0)),             # w1'
                pl.BlockSpec((27, cin, mid), lambda b, i: (0, 0, 0)),      # stacked dilated taps
                pl.BlockSpec((4, mid, mid), lambda b, i: (0, 0, 0)),       # final-conv chunks 1..4
                pl.BlockSpec((4, 1, mid), lambda b, i: (0, 0, 0)),         # branch BN biases
                pl.BlockSpec((1, 1, mid), lambda b, i: (b, 0, 0)),         # per-batch final bias
            ],
            out_specs=pl.BlockSpec((1, th, W, mid), lambda b, i: (b, i, 0, 0)),
            scratch_shapes=[pltpu.VMEM((Hp, Wp, cin), compute_dtype)],
        ),
        compiler_params=pltpu.CompilerParams(
            dimension_semantics=("parallel", "arbitrary"),
            vmem_limit_bytes=32 * 1024 * 1024),
    )(x, p["w1k"].astype(compute_dtype), p["wdk"].astype(compute_dtype),
      p["wf_loc"].astype(compute_dtype), p["bb"].astype(jnp.float32),
      bf.astype(jnp.float32))


# ----------------------------------------------------------------------------
# Parameter preparation: PyTorch (Cout, Cin, kh, kw) weights + BN stats ->
# kernel layouts with BN scales folded in.
# ----------------------------------------------------------------------------
def prepare_params(w1, w2, w3, w4, wg, wf, bn, dilations, eps=1e-5):
    def fold(key):
        g, b, m, v = bn[key]
        s = g / jnp.sqrt(v + eps)
        t = b - m * s
        return s.astype(jnp.float32), t.astype(jnp.float32)

    s1, t1 = fold("bn1"); s2, t2 = fold("bn2"); s3, t3 = fold("bn3"); s4, t4 = fold("bn4")
    sg, tg = fold("bng"); sf, tf = fold("bnf")
    mid, cin = w1.shape[0], w1.shape[1]

    w1k = jnp.transpose(w1[:, :, 0, 0], (1, 0)) * s1[None, :]          # (cin, mid)
    wgk = jnp.transpose(wg[:, :, 0, 0], (1, 0)) * sg[None, :]          # (cin, mid)

    def dconv(w, s):
        wt = jnp.transpose(w, (2, 3, 1, 0)) * s[None, None, None, :]   # (3,3,cin,mid)
        return wt.reshape(9, cin, mid)

    wdk = jnp.concatenate([dconv(w2, s2), dconv(w3, s3), dconv(w4, s4)], axis=0)  # (27,cin,mid)

    wfT = jnp.transpose(wf[:, :, 0, 0], (1, 0)) * sf[None, :]          # (5*mid, mid)
    wf_chunks = wfT.reshape(5, mid, mid)                               # per concat-chunk

    return dict(
        w1k=w1k, wgk=wgk, wdk=wdk,
        wf_loc=wf_chunks[:4],                   # chunks for aspp1..aspp4
        wf_gap=wf_chunks[4],                    # chunk for the global branch
        bb=jnp.stack([t1, t2, t3, t4])[:, None, :],   # (4, 1, mid)
        tg=tg[None, :], tf=tf[None, :],               # (1, mid)
        dils=tuple(int(d) for d in dilations[1:]),
    )


def aspp_forward(x_nchw, params, *, compute_dtype=jnp.float32):
    """ASPP forward, eval semantics.  (N, Cin, H, W) -> (N, mid, H, W)."""
    x = jnp.transpose(x_nchw, (0, 2, 3, 1)).astype(compute_dtype)     # NHWC
    bf = _global_branch_call(x, params, compute_dtype)                # (N, 1, mid)
    out = _aspp_main_call(x, params, bf, compute_dtype)               # (N, H, W, mid)
    return jnp.transpose(out, (0, 3, 1, 2)).astype(x_nchw.dtype)      # Dropout = identity (eval)


# ----------------------------------------------------------------------------
# Pure-XLA reference (mirrors the PyTorch module in eval mode).
# ----------------------------------------------------------------------------
def aspp_reference(x_nchw, w1, w2, w3, w4, wg, wf, bn, dilations, eps=1e-5):
    def conv(x, w, dil, pad):
        return jax.lax.conv_general_dilated(
            x, w, window_strides=(1, 1),
            padding=((pad, pad), (pad, pad)),
            rhs_dilation=(dil, dil),
            dimension_numbers=("NCHW", "OIHW", "NCHW"),
            precision=jax.lax.Precision.HIGHEST)

    def bn_relu(x, key):
        g, b, m, v = bn[key]
        s = g / jnp.sqrt(v + eps)
        t = b - m * s
        return jnp.maximum(x * s[None, :, None, None] + t[None, :, None, None], 0.0)

    _, d2, d3, d4 = dilations
    x1 = bn_relu(conv(x_nchw, w1, 1, 0), "bn1")
    x2 = bn_relu(conv(x_nchw, w2, d2, d2), "bn2")
    x3 = bn_relu(conv(x_nchw, w3, d3, d3), "bn3")
    x4 = bn_relu(conv(x_nchw, w4, d4, d4), "bn4")
    pooled = jnp.mean(x_nchw, axis=(2, 3), keepdims=True)
    x5 = bn_relu(conv(pooled, wg, 1, 0), "bng")
    x5 = jnp.broadcast_to(x5, x4.shape)   # bilinear upsample of a 1x1 map == broadcast
    cat = jnp.concatenate([x1, x2, x3, x4, x5], axis=1)
    return bn_relu(conv(cat, wf, 1, 0), "bnf")


if __name__ == "__main__":
    N, Cin, H, W = 2, 8, 16, 16
    mid = 8
    dilations = [1, 6, 12, 18]

    key = jax.random.PRNGKey(0)
    ks = jax.random.split(key, 7)

    def kaiming(kk, cout, cin, kh, kw):
        fan_in = cin * kh * kw
        return jax.random.normal(kk, (cout, cin, kh, kw), jnp.float32) * math.sqrt(2.0 / fan_in)

    w1 = kaiming(ks[0], mid, Cin, 1, 1)
    w2 = kaiming(ks[1], mid, Cin, 3, 3)
    w3 = kaiming(ks[2], mid, Cin, 3, 3)
    w4 = kaiming(ks[3], mid, Cin, 3, 3)
    wg = kaiming(ks[4], mid, Cin, 1, 1)
    wf = kaiming(ks[5], mid, 5 * mid, 1, 1)

    # Freshly-initialized BatchNorm (eval): gamma=1, beta=0, running_mean=0, running_var=1.
    ones = jnp.ones((mid,), jnp.float32)
    zeros = jnp.zeros((mid,), jnp.float32)
    bn = {k: (ones, zeros, zeros, ones) for k in ("bn1", "bn2", "bn3", "bn4", "bng", "bnf")}

    x = jax.random.normal(ks[6], (N, Cin, H, W), jnp.float32)

    params = prepare_params(w1, w2, w3, w4, wg, wf, bn, dilations)
    out = aspp_forward(x, params)
    out = jax.block_until_ready(out)

    assert out.shape == (N, mid, H, W), out.shape
    assert bool(jnp.all(jnp.isfinite(out)))

    ref = aspp_reference(x, w1, w2, w3, w4, wg, wf, bn, dilations)
    assert bool(jnp.allclose(out, ref, rtol=2e-2, atol=2e-2)), \
        float(jnp.max(jnp.abs(out - ref)))

    print("KERNEL_OK")
</pallas_src>

<mosaic_0001>
module attributes {stable_mosaic.version = 11 : i64} {
  func.func @_global_branch_kernel(%arg0: i32, %arg1: memref<1x16x16x8xf32, #tpu.memory_space<vmem>>, %arg2: memref<8x8xf32, #tpu.memory_space<vmem>>, %arg3: memref<1x8xf32, #tpu.memory_space<vmem>>, %arg4: memref<8x8xf32, #tpu.memory_space<vmem>>, %arg5: memref<1x8xf32, #tpu.memory_space<vmem>>, %arg6: memref<1x1x8xf32, #tpu.memory_space<vmem>>) attributes {dimension_semantics = [#tpu.dimension_semantics<parallel>], iteration_bounds = array<i64: 2>, scalar_prefetch = 0 : i64, scratch_operands = 0 : i64, tpu.core_type = #tpu.core_type<tc>, window_params = [{transform_indices = @transform_0, window_bounds = array<i64: 1, 16, 16, 8>}, {pipeline_mode = #tpu.pipeline_mode<synchronous>, transform_indices = @transform_1, window_bounds = array<i64: 8, 8>}, {pipeline_mode = #tpu.pipeline_mode<synchronous>, transform_indices = @transform_2, window_bounds = array<i64: 1, 8>}, {pipeline_mode = #tpu.pipeline_mode<synchronous>, transform_indices = @transform_3, window_bounds = array<i64: 8, 8>}, {pipeline_mode = #tpu.pipeline_mode<synchronous>, transform_indices = @transform_4, window_bounds = array<i64: 1, 8>}, {transform_indices = @transform_5, window_bounds = array<i64: 1, 1, 8>}]} {
    %c0 = arith.constant 0 : index
    %c0_0 = arith.constant 0 : index
    %c0_1 = arith.constant 0 : index
    %c0_2 = arith.constant 0 : index
    %0 = vector.load %arg1[%c0, %c0_0, %c0_1, %c0_2] : memref<1x16x16x8xf32, #tpu.memory_space<vmem>>, vector<1x16x16x8xf32>
    %1 = vector.shape_cast %0 : vector<1x16x16x8xf32> to vector<16x16x8xf32>
    %2 = vector.shape_cast %1 : vector<16x16x8xf32> to vector<256x8xf32>
    %cst = arith.constant dense<0.000000e+00> : vector<8xf32>
    %3 = vector.multi_reduction <add>, %2, %cst [0] : vector<256x8xf32> to vector<8xf32>
    %4 = vector.shape_cast %3 : vector<8xf32> to vector<1x8xf32>
    %cst_3 = arith.constant 3.906250e-03 : f32
    %5 = vector.broadcast %cst_3 : f32 to vector<1x8xf32>
    %6 = arith.mulf %4, %5 : vector<1x8xf32>
    %c0_4 = arith.constant 0 : index
    %c0_5 = arith.constant 0 : index
    %7 = vector.load %arg2[%c0_4, %c0_5] : memref<8x8xf32, #tpu.memory_space<vmem>>, vector<8x8xf32>
    %cst_6 = arith.constant dense<0.000000e+00> : vector<1x8xf32>
    %8 = tpu.matmul %6, %7, %cst_6 {dimension_numbers = #tpu.dot_dimension_numbers<[1], [0], [0], [1], [0, 0, 1, 1], [], []>} : vector<1x8xf32>, vector<8x8xf32>, vector<1x8xf32> -> vector<1x8xf32>
    %c0_7 = arith.constant 0 : index
    %c0_8 = arith.constant 0 : index
    %9 = vector.load %arg3[%c0_7, %c0_8] : memref<1x8xf32, #tpu.memory_space<vmem>>, vector<1x8xf32>
    %10 = arith.addf %8, %9 : vector<1x8xf32>
    %cst_9 = arith.constant 0.000000e+00 : f32
    %11 = vector.broadcast %cst_9 : f32 to vector<1x8xf32>
    %12 = arith.maximumf %10, %11 : vector<1x8xf32>
    %c0_10 = arith.constant 0 : index
    %c0_11 = arith.constant 0 : index
    %13 = vector.load %arg4[%c0_10, %c0_11] : memref<8x8xf32, #tpu.memory_space<vmem>>, vector<8x8xf32>
    %cst_12 = arith.constant dense<0.000000e+00> : vector<1x8xf32>
    %14 = tpu.matmul %12, %13, %cst_12 {dimension_numbers = #tpu.dot_dimension_numbers<[1], [0], [0], [1], [0, 0, 1, 1], [], []>} : vector<1x8xf32>, vector<8x8xf32>, vector<1x8xf32> -> vector<1x8xf32>
    %c0_13 = arith.constant 0 : index
    %c0_14 = arith.constant 0 : index
    %15 = vector.load %arg5[%c0_13, %c0_14] : memref<1x8xf32, #tpu.memory_space<vmem>>, vector<1x8xf32>
    %16 = arith.addf %14, %15 : vector<1x8xf32>
    %c0_15 = arith.constant 0 : index
    %c0_16 = arith.constant 0 : index
    %c0_17 = arith.constant 0 : index
    %17 = vector.load %arg6[%c0_15, %c0_16, %c0_17] : memref<1x1x8xf32, #tpu.memory_space<vmem>>, vector<1x1x8xf32>
    %18 = vector.shape_cast %17 : vector<1x1x8xf32> to vector<1x8xf32>
    %19 = vector.shape_cast %16 : vector<1x8xf32> to vector<1x1x8xf32>
    tpu.vector_store %arg6[%c0_15, %c0_16, %c0_17], %19 {strides = array<i32>} : memref<1x1x8xf32, #tpu.memory_space<vmem>>, vector<1x1x8xf32>,
    return
  }
  func.func @transform_0(%arg0: i32) -> (i32, i32, i32, i32) {
    %c0_i32 = arith.constant 0 : i32
    %c0_i32_0 = arith.constant 0 : i32
    %c0_i32_1 = arith.constant 0 : i32
    %c0_i32_2 = arith.constant 0 : i32
    return %arg0, %c0_i32, %c0_i32_0, %c0_i32_1 : i32, i32, i32, i32
  }
  func.func @transform_1(%arg0: i32) -> (i32, i32) {
    %c0_i32 = arith.constant 0 : i32
    %c0_i32_0 = arith.constant 0 : i32
    %c0_i32_1 = arith.constant 0 : i32
    return %c0_i32, %c0_i32_0 : i32, i32
  }
  func.func @transform_2(%arg0: i32) -> (i32, i32) {
    %c0_i32 = arith.constant 0 : i32
    %c0_i32_0 = arith.constant 0 : i32
    %c0_i32_1 = arith.constant 0 : i32
    return %c0_i32, %c0_i32_0 : i32, i32
  }
  func.func @transform_3(%arg0: i32) -> (i32, i32) {
    %c0_i32 = arith.constant 0 : i32
    %c0_i32_0 = arith.constant 0 : i32
    %c0_i32_1 = arith.constant 0 : i32
    return %c0_i32, %c0_i32_0 : i32, i32
  }
  func.func @transform_4(%arg0: i32) -> (i32, i32) {
    %c0_i32 = arith.constant 0 : i32
    %c0_i32_0 = arith.constant 0 : i32
    %c0_i32_1 = arith.constant 0 : i32
    return %c0_i32, %c0_i32_0 : i32, i32
  }
  func.func @transform_5(%arg0: i32) -> (i32, i32, i32) {
    %c0_i32 = arith.constant 0 : i32
    %c0_i32_0 = arith.constant 0 : i32
    %c0_i32_1 = arith.constant 0 : i32
    return %arg0, %c0_i32, %c0_i32_0 : i32, i32, i32
  }
}

</mosaic_0001>

<llo_original>
// kernel: tpu_custom_call.1
$region0: #{tpu_custom_call.1}
  #allocation0 [shape = 'u32[]', space=smem, size = 0x4, offset = 0x4, fixed_abs, tag = 'smem constant byte address 0x4 - core index']
  #allocation1 [shape = 'u32[144,128]{1,0:T(1,128)}', space=vmem, size = 0x12000, scoped, tag = 'internal scratch']
  %s0 = inlined_call_operand.vmem [shape: f32[2,16,16,8], index: 0, kind: input, shape index: {}]
  %s1 = inlined_call_operand.vmem [shape: f32[8,8], index: 1, kind: input, shape index: {}]
  %s2 = inlined_call_operand.vmem [shape: f32[1,8], index: 2, kind: input, shape index: {}]
  %s3 = inlined_call_operand.vmem [shape: f32[8,8], index: 3, kind: input, shape index: {}]
  %s4 = inlined_call_operand.vmem [shape: f32[1,8], index: 4, kind: input, shape index: {}]
  %s5 = inlined_call_operand.hbm [shape: f32[2,1,8], index: 5, kind: output, shape index: {}]
  %s6 = sld [smem:[#allocation0]]
  $region53: #{tpu_custom_call.1} parent=0
    _
  %s8 = ssub.s32 1, %s6
  %s9 = scalar_select 0, %s8, %s6
  $region1: #{tpu_custom_call.1} parent=0
    #allocation2 [shape = 'u8[1024]{0}', space=vmem, size = 0x400, scoped, tag = 'output window, operand 0']
    #allocation3 [shape = 's32[2]{0}', space=sflag, size = 0x8, scoped, tag = 'scoped memory for tpu_custom_call.1']
    %10 = vsyncpa [#allocation3], 0
    %s11 = scalar_lea.sflag [#allocation3], 1
    %12 = vsyncpa %s11, 0
    loop: start=0, step=1, limit=4
    $region2: #{tpu_custom_call.1} parent=1 // loop_pre_header
      _
    $region3: #{tpu_custom_call.1} parent=1 // loop_header
      %s14 = sphi 0, %s18
      %p15 = scmp.ge.s32.totalorder %s14, 4
      %s24 = sphi 0, %s26
      %s27 = sphi 0, %s24
      %s28 = sphi 0, %s27
      %s44 = sphi 0, %s28
      %s48 = sphi 0, %s48
      %s50 = sphi 0, %s48
      %s51 = sphi 0, %s50
      %s65 = sphi 0, %s51
      %s69 = sphi 0, %s69
      %s71 = sphi 0, %s69
      %s72 = sphi 0, %s71
      %s86 = sphi 0, %s72
      %s90 = sphi 0, %s90
      %s92 = sphi 0, %s90
      %s93 = sphi 0, %s92
      %s107 = sphi 0, %s93
      %s111 = sphi 0, %s111
      %s113 = sphi 0, %s111
      %s114 = sphi 0, %s113
      %s128 = sphi 0, %s114
      %s134 = sphi 0, %s136
      %s137 = sphi 0, %s134
      %s138 = sphi 0, %s137
      %s154 = sphi 0, %s138
    $region4: #{tpu_custom_call.1} parent=1 // loop_header_branch
      %17 = sbr.rel (%p15) target = $region8
    $region5: #{tpu_custom_call.1} parent=1 // loop_body
      %s19 = ssub.s32 %s14, 1
      %s20 = ssub.s32 %s14, 2
      %s21 = sadd.s32 %s14, 1
      %s22 = ssub.s32 %s14, %s21
      %p23 = scmp.eq.s32.totalorder %s22, 0
      %s25 = sadd.s32 %s24, 1
      %s26 = scalar_select %p23, %s24, %s25
      %p29 = pneg %p23
      %p30 = scmp.eq.s32.totalorder %s14, 1
      %p31 = por %p29, %p30
      %p32 = scmp.ne.s32.totalorder %s24, %s27
      %p33 = scmp.eq.s32.totalorder %s14, 0
      %p34 = por %p32, %p33
      %p35 = scmp.ne.s32.totalorder %s24, %s27
      %p36 = scmp.eq.s32.totalorder %s19, 1
      %p37 = por %p35, %p36
      %p38 = scmp.ne.s32.totalorder %s27, %s28
      %p39 = scmp.eq.s32.totalorder %s19, 0
      %p40 = por %p38, %p39
      %p41 = scmp.ne.s32.totalorder %s27, %s28
      %p42 = scmp.eq.s32.totalorder %s20, 1
      %p43 = por %p41, %p42
      %p45 = scmp.ne.s32.totalorder %s28, %s44
      %p46 = scmp.eq.s32.totalorder %s20, 0
      %p47 = por %p45, %p46
      %s49 = sadd.s32 %s48, 1
      %p52 = scmp.eq.s32.totalorder %s14, 1
      %p53 = scmp.ne.s32.totalorder %s48, %s50
      %p54 = scmp.eq.s32.totalorder %s14, 0
      %p55 = por %p53, %p54
      %p56 = scmp.ne.s32.totalorder %s48, %s50
      %p57 = scmp.eq.s32.totalorder %s19, 1
      %p58 = por %p56, %p57
      %p59 = scmp.ne.s32.totalorder %s50, %s51
      %p60 = scmp.eq.s32.totalorder %s19, 0
      %p61 = por %p59, %p60
      %p62 = scmp.ne.s32.totalorder %s50, %s51
      %p63 = scmp.eq.s32.totalorder %s20, 1
      %p64 = por %p62, %p63
      %p66 = scmp.ne.s32.totalorder %s51, %s65
      %p67 = scmp.eq.s32.totalorder %s20, 0
      %p68 = por %p66, %p67
      %s70 = sadd.s32 %s69, 1
      %p73 = scmp.eq.s32.totalorder %s14, 1
      %p74 = scmp.ne.s32.totalorder %s69, %s71
      %p75 = scmp.eq.s32.totalorder %s14, 0
      %p76 = por %p74, %p75
      %p77 = scmp.ne.s32.totalorder %s69, %s71
      %p78 = scmp.eq.s32.totalorder %s19, 1
      %p79 = por %p77, %p78
      %p80 = scmp.ne.s32.totalorder %s71, %s72
      %p81 = scmp.eq.s32.totalorder %s19, 0
      %p82 = por %p80, %p81
      %p83 = scmp.ne.s32.totalorder %s71, %s72
      %p84 = scmp.eq.s32.totalorder %s20, 1
      %p85 = por %p83, %p84
      %p87 = scmp.ne.s32.totalorder %s72, %s86
      %p88 = scmp.eq.s32.totalorder %s20, 0
      %p89 = por %p87, %p88
      %s91 = sadd.s32 %s90, 1
      %p94 = scmp.eq.s32.totalorder %s14, 1
      %p95 = scmp.ne.s32.totalorder %s90, %s92
      %p96 = scmp.eq.s32.totalorder %s14, 0
      %p97 = por %p95, %p96
      %p98 = scmp.ne.s32.totalorder %s90, %s92
      %p99 = scmp.eq.s32.totalorder %s19, 1
      %p100 = por %p98, %p99
      %p101 = scmp.ne.s32.totalorder %s92, %s93
      %p102 = scmp.eq.s32.totalorder %s19, 0
      %p103 = por %p101, %p102
      %p104 = scmp.ne.s32.totalorder %s92, %s93
      %p105 = scmp.eq.s32.totalorder %s20, 1
      %p106 = por %p104, %p105
      %p108 = scmp.ne.s32.totalorder %s93, %s107
      %p109 = scmp.eq.s32.totalorder %s20, 0
      %p110 = por %p108, %p109
      %s112 = sadd.s32 %s111, 1
      %p115 = scmp.eq.s32.totalorder %s14, 1
      %p116 = scmp.ne.s32.totalorder %s111, %s113
      %p117 = scmp.eq.s32.totalorder %s14, 0
      %p118 = por %p116, %p117
      %p119 = scmp.ne.s32.totalorder %s111, %s113
      %p120 = scmp.eq.s32.totalorder %s19, 1
      %p121 = por %p119, %p120
      %p122 = scmp.ne.s32.totalorder %s113, %s114
      %p123 = scmp.eq.s32.totalorder %s19, 0
      %p124 = por %p122, %p123
      %p125 = scmp.ne.s32.totalorder %s113, %s114
      %p126 = scmp.eq.s32.totalorder %s20, 1
      %p127 = por %p125, %p126
      %p129 = scmp.ne.s32.totalorder %s114, %s128
      %p130 = scmp.eq.s32.totalorder %s20, 0
      %p131 = por %p129, %p130
      %s132 = ssub.s32 %s14, %s21
      %p133 = scmp.eq.s32.totalorder %s132, 0
      %s135 = sadd.s32 %s134, 1
      %s136 = scalar_select %p133, %s134, %s135
      %p139 = pneg %p133
      %p140 = scmp.eq.s32.totalorder %s14, 1
      %p141 = por %p139, %p140
      %p142 = scmp.ne.s32.totalorder %s134, %s137
      %p143 = scmp.eq.s32.totalorder %s14, 0
      %p144 = por %p142, %p143
      %p145 = scmp.ne.s32.totalorder %s134, %s137
      %p146 = scmp.eq.s32.totalorder %s19, 1
      %p147 = por %p145, %p146
      %p148 = scmp.ne.s32.totalorder %s137, %s138
      %p149 = scmp.eq.s32.totalorder %s19, 0
      %p150 = por %p148, %p149
      %p151 = scmp.ne.s32.totalorder %s137, %s138
      %p152 = scmp.eq.s32.totalorder %s20, 1
      %p153 = por %p151, %p152
      %p155 = scmp.ne.s32.totalorder %s138, %s154
      %p156 = scmp.eq.s32.totalorder %s20, 0
      %p157 = por %p155, %p156
      %p158 = scmp.le.s32.totalorder 1, %s14
      %p159 = scmp.lt.s32.totalorder %s14, 3
      %p160 = pnand %p158, %p159
      %p161 = pneg %p160
      // Predicated region
      $region9: #{tpu_custom_call.1} parent=5 // pred_check
        _
      $region10: #{tpu_custom_call.1} parent=5 // pred_check_branch
        %163 = sbr.rel (%p160) target = $region12
      $region11: #{tpu_custom_call.1} parent=5 // pred_region
        %s164 = ssub.s32 %s14, 1
        // Predicated region
        $region13: #{tpu_custom_call.1} parent=11 // pred_check
          %p165 = pneg %p61
        $region14: #{tpu_custom_call.1} parent=11 // pred_check_branch
          %167 = sbr.rel (%p165) target = $region16
        $region15: #{tpu_custom_call.1} parent=11 // pred_region
          _
        $region16: #{tpu_custom_call.1} parent=11 // pred_fallthru
          _
        // Predicated region
        $region17: #{tpu_custom_call.1} parent=11 // pred_check
          %p168 = pneg %p82
        $region18: #{tpu_custom_call.1} parent=11 // pred_check_branch
          %170 = sbr.rel (%p168) target = $region20
        $region19: #{tpu_custom_call.1} parent=11 // pred_region
          _
        $region20: #{tpu_custom_call.1} parent=11 // pred_fallthru
          _
        // Predicated region
        $region21: #{tpu_custom_call.1} parent=11 // pred_check
          %p171 = pneg %p103
        $region22: #{tpu_custom_call.1} parent=11 // pred_check_branch
          %173 = sbr.rel (%p171) target = $region24
        $region23: #{tpu_custom_call.1} parent=11 // pred_region
          _
        $region24: #{tpu_custom_call.1} parent=11 // pred_fallthru
          _
        // Predicated region
        $region25: #{tpu_custom_call.1} parent=11 // pred_check
          %p174 = pneg %p124
        $region26: #{tpu_custom_call.1} parent=11 // pred_check_branch
          %176 = sbr.rel (%p174) target = $region28
        $region27: #{tpu_custom_call.1} parent=11 // pred_region
          _
        $region28: #{tpu_custom_call.1} parent=11 // pred_fallthru
          _
      $region12: #{tpu_custom_call.1} parent=5 // pred_fallthru
        _
      %p177 = scmp.lt.s32.totalorder %s14, 2
      // Predicated region
      $region29: #{tpu_custom_call.1} parent=5 // pred_check
        %p178 = pneg %p177
      $region30: #{tpu_custom_call.1} parent=5 // pred_check_branch
        %180 = sbr.rel (%p178) target = $region32
      $region31: #{tpu_custom_call.1} parent=5 // pred_region
        // Predicated region
        $region33: #{tpu_custom_call.1} parent=31 // pred_check
          %p181 = pneg %p34
        $region34: #{tpu_custom_call.1} parent=31 // pred_check_branch
          %183 = sbr.rel (%p181) target = $region36
        $region35: #{tpu_custom_call.1} parent=31 // pred_region
          %p184 = scmp.lt.s32.totalorder %s14, 1
          %s185 = scalar_select %p184, %s14, 1
          %s186 = smul.addr %s185, 32
          %s187 = smul.addr %s186, 8
          %s188 = scalar_lea.vmem %s0, %s187
        $region36: #{tpu_custom_call.1} parent=31 // pred_fallthru
          _
      $region32: #{tpu_custom_call.1} parent=5 // pred_fallthru
        _
      %p189 = scmp.le.s32.totalorder 1, %s14
      %p190 = scmp.lt.s32.totalorder %s14, 3
      %p191 = pnand %p189, %p190
      %p192 = pneg %p191
      // Predicated region
      $region37: #{tpu_custom_call.1} parent=5 // pred_check
        _
      $region38: #{tpu_custom_call.1} parent=5 // pred_check_branch
        %194 = sbr.rel (%p191) target = $region40
      $region39: #{tpu_custom_call.1} parent=5 // pred_region
        %s195 = ssub.s32 %s14, 1
        %p196 = scmp.lt.s32.totalorder %s19, 1
        %s197 = scalar_select %p196, %s19, 1
        %s198 = smul.addr %s197, 32
        %s199 = smul.addr %s198, 8
        %s200 = scalar_lea.vmem %s0, %s199
        %p201 = pneg %p40
        %p202 = pneg %p37
        %p203 = pneg %p61
        %p204 = pneg %p58
        %p205 = pneg %p82
        %p206 = pneg %p79
        %p207 = pneg %p103
        %p208 = pneg %p100
        %p209 = pneg %p124
        %p210 = pneg %p121
        %p211 = pneg %p150
        %p212 = pneg %p147
        %s213 = sand.u32 %s137, 1
        %s214 = scalar_lea.sflag [#allocation3], %s213
        %s215 = sand.u32 %s137, 1
        %s216 = scalar_lea.vmem [#allocation2], %s215
        %p217 = scmp.lt.s32.totalorder %s19, 1
        %s218 = scalar_select %p217, %s19, 1
        %s219 = smul.addr %s218, 32
        %s220 = smul.addr %s219, 8
        %s221 = scalar_lea.vmem %s0, %s220
        %v222 = vld [vmem:[%s221] sm:$0xff]
        %v223 = vld [vmem:[%s221 + $0x8] sm:$0xff]
        %v224 = vld [vmem:[%s221 + $0x10] sm:$0xff]
        %v225 = vld [vmem:[%s221 + $0x18] sm:$0xff]
        %v226 = vld [vmem:[%s221 + $0x20] sm:$0xff]
        %v227 = vld [vmem:[%s221 + $0x28] sm:$0xff]
        %v228 = vld [vmem:[%s221 + $0x30] sm:$0xff]
        %v229 = vld [vmem:[%s221 + $0x38] sm:$0xff]
        %v230 = vld [vmem:[%s221 + $0x40] sm:$0xff]
        %v231 = vld [vmem:[%s221 + $0x48] sm:$0xff]
        %v232 = vld [vmem:[%s221 + $0x50] sm:$0xff]
        %v233 = vld [vmem:[%s221 + $0x58] sm:$0xff]
        %v234 = vld [vmem:[%s221 + $0x60] sm:$0xff]
        %v235 = vld [vmem:[%s221 + $0x68] sm:$0xff]
        %v236 = vld [vmem:[%s221 + $0x70] sm:$0xff]
        %v237 = vld [vmem:[%s221 + $0x78] sm:$0xff]
        %v238 = vld [vmem:[%s221 + $0x80] sm:$0xff]
        %v239 = vld [vmem:[%s221 + $0x88] sm:$0xff]
        %v240 = vld [vmem:[%s221 + $0x90] sm:$0xff]
        %v241 = vld [vmem:[%s221 + $0x98] sm:$0xff]
        %v242 = vld [vmem:[%s221 + $0xa0] sm:$0xff]
        %v243 = vld [vmem:[%s221 + $0xa8] sm:$0xff]
        %v244 = vld [vmem:[%s221 + $0xb0] sm:$0xff]
        %v245 = vld [vmem:[%s221 + $0xb8] sm:$0xff]
        %v246 = vld [vmem:[%s221 + $0xc0] sm:$0xff]
        %v247 = vld [vmem:[%s221 + $0xc8] sm:$0xff]
        %v248 = vld [vmem:[%s221 + $0xd0] sm:$0xff]
        %v249 = vld [vmem:[%s221 + $0xd8] sm:$0xff]
        %v250 = vld [vmem:[%s221 + $0xe0] sm:$0xff]
        %v251 = vld [vmem:[%s221 + $0xe8] sm:$0xff]
        %v252 = vld [vmem:[%s221 + $0xf0] sm:$0xff]
        %v253 = vld [vmem:[%s221 + $0xf8] sm:$0xff]
        %vm254 = vcmask 64512
        %v255 = vsel %vm254, %v222, 0.0
        %v256 = vsel %vm254, %v223, 0.0
        %v257 = vadd.f32 %v255, %v256
        %v258 = vsel %vm254, %v224, 0.0
        %v259 = vadd.f32 %v257, %v258
        %v260 = vsel %vm254, %v225, 0.0
        %v261 = vadd.f32 %v259, %v260
        %v262 = vsel %vm254, %v226, 0.0
        %v263 = vadd.f32 %v261, %v262
        %v264 = vsel %vm254, %v227, 0.0
        %v265 = vadd.f32 %v263, %v264
        %v266 = vsel %vm254, %v228, 0.0
        %v267 = vadd.f32 %v265, %v266
        %v268 = vsel %vm254, %v229, 0.0
        %v269 = vadd.f32 %v267, %v268
        %v270 = vsel %vm254, %v230, 0.0
        %v271 = vadd.f32 %v269, %v270
        %v272 = vsel %vm254, %v231, 0.0
        %v273 = vadd.f32 %v271, %v272
        %v274 = vsel %vm254, %v232, 0.0
        %v275 = vadd.f32 %v273, %v274
        %v276 = vsel %vm254, %v233, 0.0
        %v277 = vadd.f32 %v275, %v276
        %v278 = vsel %vm254, %v234, 0.0
        %v279 = vadd.f32 %v277, %v278
        %v280 = vsel %vm254, %v235, 0.0
        %v281 = vadd.f32 %v279, %v280
        %v282 = vsel %vm254, %v236, 0.0
        %v283 = vadd.f32 %v281, %v282
        %v284 = vsel %vm254, %v237, 0.0
        %v285 = vadd.f32 %v283, %v284
        %v286 = vsel %vm254, %v238, 0.0
        %v287 = vadd.f32 %v285, %v286
        %v288 = vsel %vm254, %v239, 0.0
        %v289 = vadd.f32 %v287, %v288
        %v290 = vsel %vm254, %v240, 0.0
        %v291 = vadd.f32 %v289, %v290
        %v292 = vsel %vm254, %v241, 0.0
        %v293 = vadd.f32 %v291, %v292
        %v294 = vsel %vm254, %v242, 0.0
        %v295 = vadd.f32 %v293, %v294
        %v296 = vsel %vm254, %v243, 0.0
        %v297 = vadd.f32 %v295, %v296
        %v298 = vsel %vm254, %v244, 0.0
        %v299 = vadd.f32 %v297, %v298
        %v300 = vsel %vm254, %v245, 0.0
        %v301 = vadd.f32 %v299, %v300
        %v302 = vsel %vm254, %v246, 0.0
        %v303 = vadd.f32 %v301, %v302
        %v304 = vsel %vm254, %v247, 0.0
        %v305 = vadd.f32 %v303, %v304
        %v306 = vsel %vm254, %v248, 0.0
        %v307 = vadd.f32 %v305, %v306
        %v308 = vsel %vm254, %v249, 0.0
        %v309 = vadd.f32 %v307, %v308
        %v310 = vsel %vm254, %v250, 0.0
        %v311 = vadd.f32 %v309, %v310
        %v312 = vsel %vm254, %v251, 0.0
        %v313 = vadd.f32 %v311, %v312
        %v314 = vsel %vm254, %v252, 0.0
        %v315 = vadd.f32 %v313, %v314
        %v316 = vsel %vm254, %v253, 0.0
        %v317 = vadd.f32 %v315, %v316
        %v318 = vrot.slane %v317, 4
        %v319 = vadd.f32 %v317, %v318
        %v320 = vrot.slane %v319, 2
        %v321 = vadd.f32 %v319, %v320
        %v322 = vrot.slane %v321, 1
        %v323 = vadd.f32 %v321, %v322
        %v324 = vmul.f32 %v323, 0.00390625
        %v325 = vld [vmem:[%s1] sm:$0xff]
        %v326 = vld [vmem:[%s2] sm:$0x1]
        %v328 = vsel %vm254, %v324, 0
        %330 = vmatprep.subr.mxu0 0.0
        %331 = vmatpush1.msra.mxu0 %v325
        %332 = vmatprep.subr.mxu0 0.0
        %333 = vmatpush1.msra.mxu0 0.0
        %334 = vmatprep.subr.mxu0 0.0
        %335 = vmatpush1.msra.mxu0 0.0
        %336 = vmatprep.subr.mxu0 0.0
        %337 = vmatpush1.msra.mxu0 0.0
        %338 = vmatprep.subr.mxu0 0.0
        %339 = vmatpush1.msra.mxu0 0.0
        %340 = vmatprep.subr.mxu0 0.0
        %341 = vmatpush1.msra.mxu0 0.0
        %342 = vmatprep.subr.mxu0 0.0
        %343 = vmatpush1.msra.mxu0 0.0
        %344 = vmatprep.subr.mxu0 0.0
        %345 = vmatpush1.msra.mxu0 0.0
        %346 = vmatprep.subr.mxu0 0.0
        %347 = vmatpush1.msra.mxu0 0.0
        %348 = vmatprep.subr.mxu0 0.0
        %349 = vmatpush1.msra.mxu0 0.0
        %350 = vmatprep.subr.mxu0 0.0
        %351 = vmatpush1.msra.mxu0 0.0
        %352 = vmatprep.subr.mxu0 0.0
        %353 = vmatpush1.msra.mxu0 0.0
        %354 = vmatprep.subr.mxu0 0.0
        %355 = vmatpush1.msra.mxu0 0.0
        %356 = vmatprep.subr.mxu0 0.0
        %357 = vmatpush1.msra.mxu0 0.0
        %358 = vmatprep.subr.mxu0 0.0
        %359 = vmatpush1.msra.mxu0 0.0
        %360 = vmatprep.subr.mxu0 0.0
        %361 = vmatpush1.msra.mxu0 0.0
        %362 = vmatprep.subr.mxu0 0.0
        %363 = vmatpush1.msra.mxu0 0.0
        %364 = vmatprep.subr.mxu0 0.0
        %365 = vmatpush1.msra.mxu0 0.0
        %366 = vmatprep.subr.mxu0 0.0
        %367 = vmatpush1.msra.mxu0 0.0
        %368 = vmatprep.subr.mxu0 0.0
        %369 = vmatpush1.msra.mxu0 0.0
        %370 = vmatprep.subr.mxu0 0.0
        %371 = vmatpush1.msra.mxu0 0.0
        %372 = vmatprep.subr.mxu0 0.0
        %373 = vmatpush1.msra.mxu0 0.0
        %374 = vmatprep.subr.mxu0 0.0
        %375 = vmatpush1.msra.mxu0 0.0
        %376 = vmatprep.subr.mxu0 0.0
        %377 = vmatpush1.msra.mxu0 0.0
        %378 = vmatprep.subr.mxu0 0.0
        %379 = vmatpush1.msra.mxu0 0.0
        %380 = vmatprep.subr.mxu0 0.0
        %381 = vmatpush1.msra.mxu0 0.0
        %382 = vmatprep.subr.mxu0 0.0
        %383 = vmatpush1.msra.mxu0 0.0
        %384 = vmatprep.subr.mxu0 0.0
        %385 = vmatpush1.msra.mxu0 0.0
        %386 = vmatprep.subr.mxu0 0.0
        %387 = vmatpush1.msra.mxu0 0.0
        %388 = vmatprep.subr.mxu0 0.0
        %389 = vmatpush1.msra.mxu0 0.0
        %390 = vmatprep.subr.mxu0 0.0
        %391 = vmatpush1.msra.mxu0 0.0
        %392 = vmatprep.subr.mxu0 0.0
        %393 = vmatpush1.msra.mxu0 0.0
        %394 = vmatprep.mubr.f32.mxu0 0.0
        %395 = vmatmul.mubr.f32.gmra.mrb[0].mxu0 %v328
        %v396 = vpop.f32.mrb[0].mxu0
        %v397 = vadd.f32 %v326, %v396
        %v398 = vpop.f32.mrb[0].mxu0
        %399 = vdwg.mxu0
        %v400 = vmax.f32 %v397, 0.0
        %v401 = vld [vmem:[%s3] sm:$0xff]
        %v402 = vld [vmem:[%s4] sm:$0x1]
        %v404 = vsel %vm254, %v400, 0
        %406 = vmatprep.subr.mxu0 0.0
        %407 = vmatpush1.msra.mxu0 %v401
        %408 = vmatprep.subr.mxu0 0.0
        %409 = vmatpush1.msra.mxu0 0.0
        %410 = vmatprep.subr.mxu0 0.0
        %411 = vmatpush1.msra.mxu0 0.0
        %412 = vmatprep.subr.mxu0 0.0
        %413 = vmatpush1.msra.mxu0 0.0
        %414 = vmatprep.subr.mxu0 0.0
        %415 = vmatpush1.msra.mxu0 0.0
        %416 = vmatprep.subr.mxu0 0.0
        %417 = vmatpush1.msra.mxu0 0.0
        %418 = vmatprep.subr.mxu0 0.0
        %419 = vmatpush1.msra.mxu0 0.0
        %420 = vmatprep.subr.mxu0 0.0
        %421 = vmatpush1.msra.mxu0 0.0
        %422 = vmatprep.subr.mxu0 0.0
        %423 = vmatpush1.msra.mxu0 0.0
        %424 = vmatprep.subr.mxu0 0.0
        %425 = vmatpush1.msra.mxu0 0.0
        %426 = vmatprep.subr.mxu0 0.0
        %427 = vmatpush1.msra.mxu0 0.0
        %428 = vmatprep.subr.mxu0 0.0
        %429 = vmatpush1.msra.mxu0 0.0
        %430 = vmatprep.subr.mxu0 0.0
        %431 = vmatpush1.msra.mxu0 0.0
        %432 = vmatprep.subr.mxu0 0.0
        %433 = vmatpush1.msra.mxu0 0.0
        %434 = vmatprep.subr.mxu0 0.0
        %435 = vmatpush1.msra.mxu0 0.0
        %436 = vmatprep.subr.mxu0 0.0
        %437 = vmatpush1.msra.mxu0 0.0
        %438 = vmatprep.subr.mxu0 0.0
        %439 = vmatpush1.msra.mxu0 0.0
        %440 = vmatprep.subr.mxu0 0.0
        %441 = vmatpush1.msra.mxu0 0.0
        %442 = vmatprep.subr.mxu0 0.0
        %443 = vmatpush1.msra.mxu0 0.0
        %444 = vmatprep.subr.mxu0 0.0
        %445 = vmatpush1.msra.mxu0 0.0
        %446 = vmatprep.subr.mxu0 0.0
        %447 = vmatpush1.msra.mxu0 0.0
        %448 = vmatprep.subr.mxu0 0.0
        %449 = vmatpush1.msra.mxu0 0.0
        %450 = vmatprep.subr.mxu0 0.0
        %451 = vmatpush1.msra.mxu0 0.0
        %452 = vmatprep.subr.mxu0 0.0
        %453 = vmatpush1.msra.mxu0 0.0
        %454 = vmatprep.subr.mxu0 0.0
        %455 = vmatpush1.msra.mxu0 0.0
        %456 = vmatprep.subr.mxu0 0.0
        %457 = vmatpush1.msra.mxu0 0.0
        %458 = vmatprep.subr.mxu0 0.0
        %459 = vmatpush1.msra.mxu0 0.0
        %460 = vmatprep.subr.mxu0 0.0
        %461 = vmatpush1.msra.mxu0 0.0
        %462 = vmatprep.subr.mxu0 0.0
        %463 = vmatpush1.msra.mxu0 0.0
        %464 = vmatprep.subr.mxu0 0.0
        %465 = vmatpush1.msra.mxu0 0.0
        %466 = vmatprep.subr.mxu0 0.0
        %467 = vmatpush1.msra.mxu0 0.0
        %468 = vmatprep.subr.mxu0 0.0
        %469 = vmatpush1.msra.mxu0 0.0
        %470 = vmatprep.mubr.f32.mxu0 0.0
        %471 = vmatmul.mubr.f32.gmra.mrb[0].mxu0 %v404
        %v472 = vpop.f32.mrb[0].mxu0
        %v473 = vadd.f32 %v402, %v472
        %v474 = vpop.f32.mrb[0].mxu0
        %475 = vdwg.mxu0
        %vm476 = vcmask 57344
        %477 = vst.msk [vmem:[%s216] sm:$0x1] %vm476, %v473
        %s478 = sand.u32 %s137, 1
        %s479 = scalar_lea.sflag [#allocation3], %s478
        %s480 = sand.u32 %s137, 1
        %s481 = scalar_lea.vmem [#allocation2], %s480
        // Predicated region
        $region41: #{tpu_custom_call.1} parent=39 // pred_check
          %p482 = pneg %p147
        $region42: #{tpu_custom_call.1} parent=39 // pred_check_branch
          %484 = sbr.rel (%p482) target = $region44
        $region43: #{tpu_custom_call.1} parent=39 // pred_region
          %s486 = ssub.s32 16, 16
          %487 = vsyncadd %s479, %s486
          %s488 = smul.addr %s19, 16
          %s489 = scalar_lea.hbm %s5, %s488
          %s491 = sshll.u32 %s481, 4
          %s492 = int_to_ptr.vmem [resolvable:$true] %s491
          %494 = dma.vmem_to_hbm [thread:$0]  %s492, 16, %s489, %s479
        $region44: #{tpu_custom_call.1} parent=39 // pred_fallthru
          _
      $region40: #{tpu_custom_call.1} parent=5 // pred_fallthru
        _
      %p495 = scmp.le.s32.totalorder 2, %s14
      // Predicated region
      $region45: #{tpu_custom_call.1} parent=5 // pred_check
        %p496 = pneg %p495
      $region46: #{tpu_custom_call.1} parent=5 // pred_check_branch
        %498 = sbr.rel (%p496) target = $region48
      $region47: #{tpu_custom_call.1} parent=5 // pred_region
        %s499 = ssub.s32 %s14, 2
        // Predicated region
        $region49: #{tpu_custom_call.1} parent=47 // pred_check
          %p500 = pneg %p153
        $region50: #{tpu_custom_call.1} parent=47 // pred_check_branch
          %502 = sbr.rel (%p500) target = $region52
        $region51: #{tpu_custom_call.1} parent=47 // pred_region
          %s503 = sand.u32 %s138, 1
          %s504 = scalar_lea.sflag [#allocation3], %s503
          %s505 = sand.u32 %s138, 1
          %s506 = scalar_lea.vmem [#allocation2], %s505
          %507 = dma.done %s504, 16
        $region52: #{tpu_custom_call.1} parent=47 // pred_fallthru
          _
      $region48: #{tpu_custom_call.1} parent=5 // pred_fallthru
        _
    $region6: #{tpu_custom_call.1} parent=1 // loop_footer
      %s18 = sadd.s32 1, %s14
    $region7: #{tpu_custom_call.1} parent=1 // loop_footer_branch
      %13 = sbr.rel target = $region3
    $region8: #{tpu_custom_call.1} parent=1 // loop_exit
      _
    %508 = vsyncpa [#allocation3], 1
    %s509 = scalar_lea.sflag [#allocation3], 1
    %510 = vsyncpa %s509, 1

</llo_original>
